<compile_context>
chip_gen: v7x
topology: tpu7x:2x2x1
jax: 0.10.0
libtpu: 0.0.40
codegen_flags: <defaults>
</compile_context>

<pallas_src>
import functools

import jax
import jax.numpy as jnp
from jax.experimental import pallas as pl
from jax.experimental.pallas import tpu as pltpu


# -----------------------------------------------------------------------------
# Device / tiling helpers
# -----------------------------------------------------------------------------
def _device_packing():
    """Block-diag packing factor P and max (un-packed) row tile for the local TPU."""
    try:
        kind = jax.devices()[0].device_kind.lower()
    except Exception:  # pragma: no cover - CPU fallback
        kind = ""
    if ("v6" in kind) or ("v7" in kind):
        return 8, 4096          # 256-wide MXU (v6e / v7x)
    return 4, 2048              # 128-wide MXU (v5e / v5p / v4 / older)


def _pick_packed_tile(np_rows: int, tmp_max: int, min_steps: int = 4) -> int:
    """Packed-row tile (multiple of 8, capped at tmp_max) that keeps >= min_steps
    grid steps when there is enough work (v7x megacore balance + pipelining)."""
    if np_rows >= min_steps * tmp_max:
        return tmp_max
    per = -(-np_rows // min_steps)
    tmp = ((per + 7) // 8) * 8
    return max(8, min(tmp_max, tmp))


def _block_diag(w, p: int):
    """(a, b) -> (p*a, p*b) block-diagonal with p copies of w on the diagonal."""
    return jnp.kron(jnp.eye(p, dtype=w.dtype), w)


# -----------------------------------------------------------------------------
# Kernel: whole hot path (3-layer MLP + sigmoid + per-channel affine) in one call
# -----------------------------------------------------------------------------
def _volume_material_kernel(x_ref, w1_ref, w2_ref, w3_ref, hb_ref, c_ref, o_ref):
    # x_ref: (TMP, P*DI) bf16 — P batch rows packed per physical row (lane-dense).
    # Block-diagonal weights make the packed matmul exactly equal to the per-row MLP.

    # ---- layer 1 (bf16 MXU, f32 accumulation) + bias + ReLU
    h = jnp.dot(x_ref[...], w1_ref[...], preferred_element_type=jnp.float32)
    h = jnp.maximum(h + hb_ref[0:1, :], 0.0)

    # ---- layer 2
    h = jnp.dot(h.astype(jnp.bfloat16), w2_ref[...],
                preferred_element_type=jnp.float32)
    h = jnp.maximum(h + hb_ref[1:2, :], 0.0)

    # ---- layer 3 + sigmoid material_activation
    m = jnp.dot(h.astype(jnp.bfloat16), w3_ref[...],
                preferred_element_type=jnp.float32)
    m = jax.nn.sigmoid(m + c_ref[0:1, :])

    # ---- fused per-channel affine (albedo / roughness / metallic scale+bias,
    #      tiled P times to match the packed layout)
    o_ref[...] = (m * c_ref[1:2, :] + c_ref[2:3, :]).astype(o_ref.dtype)


# -----------------------------------------------------------------------------
# Wrapper module
# -----------------------------------------------------------------------------
class VolumeMaterialPallas:
    def __init__(
        self,
        input_feature_dim: int = 16,
        n_output_dims: int = 5,
        hidden_dim: int = 32,
        albedo_bias: float = 0.03,
        albedo_scale: float = 0.77,
        roughness_bias: float = 0.09,
        roughness_scale: float = 0.9,
        metallic_bias: float = 0.0,
        metallic_scale: float = 1.0,
        seed: int = 0,
    ):
        assert n_output_dims >= 4, "need >= 4 output dims (albedo x3 + roughness)"
        self.n_input_dims = input_feature_dim
        self.n_output_dims = n_output_dims
        self.hidden_dim = hidden_dim

        # device-dependent block-diag packing factor / tile cap
        self.P, tm_max = _device_packing()
        self.tmp_max = max(8, tm_max // self.P)

        key = jax.random.PRNGKey(seed)
        k1, k2, k3 = jax.random.split(key, 3)

        def _init(k, fan_in, fan_out):
            lim = 1.0 / jnp.sqrt(jnp.float32(fan_in))
            return jax.random.uniform(
                k, (fan_in, fan_out), jnp.float32, minval=-lim, maxval=lim
            )

        # f32 master weights (used by the pure-JAX reference)
        self.w1_f32 = _init(k1, input_feature_dim, hidden_dim)
        self.w2_f32 = _init(k2, hidden_dim, hidden_dim)
        self.w3_f32 = _init(k3, hidden_dim, n_output_dims)
        self.b1 = jnp.zeros((hidden_dim,), jnp.float32)
        self.b2 = jnp.zeros((hidden_dim,), jnp.float32)
        self.b3 = jnp.zeros((n_output_dims,), jnp.float32)

        # plain bf16 copies (precision-matched reference)
        self.w1 = self.w1_f32.astype(jnp.bfloat16)
        self.w2 = self.w2_f32.astype(jnp.bfloat16)
        self.w3 = self.w3_f32.astype(jnp.bfloat16)

        # per-output-channel affine: [albedo x3, roughness, metallic...]
        scale = [albedo_scale] * 3 + [roughness_scale] + [metallic_scale] * (
            n_output_dims - 4
        )
        bias = [albedo_bias] * 3 + [roughness_bias] + [metallic_bias] * (
            n_output_dims - 4
        )
        self.out_scale = jnp.asarray(scale, jnp.float32)
        self.out_bias = jnp.asarray(bias, jnp.float32)

        # --- block-diagonal packed weights (bf16, MXU-native) --------------------
        P = self.P
        self.w1_bd = _block_diag(self.w1_f32, P).astype(jnp.bfloat16)  # (P*DI, P*H)
        self.w2_bd = _block_diag(self.w2_f32, P).astype(jnp.bfloat16)  # (P*H,  P*H)
        self.w3_bd = _block_diag(self.w3_f32, P).astype(jnp.bfloat16)  # (P*H,  P*DO)

        # packed constants: hidden biases (2, P*H); [b3; scale; bias] (3, P*DO)
        self.hb = jnp.stack([jnp.tile(self.b1, P), jnp.tile(self.b2, P)], axis=0)
        self.c = jnp.stack(
            [jnp.tile(self.b3, P), jnp.tile(self.out_scale, P),
             jnp.tile(self.out_bias, P)], axis=0)

    @functools.partial(jax.jit, static_argnums=0)
    def __call__(self, features, *args):
        DI, H, DO, P = self.n_input_dims, self.hidden_dim, self.n_output_dims, self.P

        flat = [features.reshape(-1, features.shape[-1])] + [
            a.reshape(-1, a.shape[-1]) for a in args
        ]
        assert sum(int(x.shape[-1]) for x in flat) == DI, "input feature dim mismatch"
        n_rows = flat[0].shape[0]
        for x in flat:
            assert x.shape[0] == n_rows, "row count mismatch between inputs"

        # torch.cat fused once in XLA (bf16, so f32 callers stream half the bytes);
        # the packed (N/P, P*DI) view is a free row-major reshape.
        inp = jnp.concatenate([x.astype(jnp.bfloat16) for x in flat], axis=-1)

        TMP = _pick_packed_tile(pl.cdiv(n_rows, P), self.tmp_max)
        TM = TMP * P
        n_pad = (-n_rows) % TM          # pad to whole tiles: all blocks full / zero-filled
        if n_pad:
            inp = jnp.pad(inp, ((0, n_pad), (0, 0)))
        n_tot = n_rows + n_pad
        np_rows = n_tot // P
        packed = inp.reshape(np_rows, P * DI)
        grid = (np_rows // TMP,)

        in_specs = [
            pl.BlockSpec((TMP, P * DI), lambda i: (i, 0)),      # packed input
            pl.BlockSpec((P * DI, P * H), lambda i: (0, 0)),    # w1_bd
            pl.BlockSpec((P * H, P * H), lambda i: (0, 0)),     # w2_bd
            pl.BlockSpec((P * H, P * DO), lambda i: (0, 0)),    # w3_bd
            pl.BlockSpec((2, P * H), lambda i: (0, 0)),         # [b1; b2] tiled
            pl.BlockSpec((3, P * DO), lambda i: (0, 0)),        # [b3; scale; bias] tiled
        ]
        weights = (self.w1_bd, self.w2_bd, self.w3_bd, self.hb, self.c)

        # advisory cost: actual MXU work of the block-diag matmuls
        flops = 2 * np_rows * ((P * DI) * (P * H) + (P * H) * (P * H)
                               + (P * H) * (P * DO))
        bytes_accessed = (
            packed.size * packed.dtype.itemsize
            + np_rows * P * DO * 4
            + sum(w.size * w.dtype.itemsize for w in weights)
        )
        cost = pl.CostEstimate(
            flops=flops,
            transcendentals=n_tot * DO,
            bytes_accessed=bytes_accessed,
        )

        out = pl.pallas_call(
            _volume_material_kernel,
            out_shape=jax.ShapeDtypeStruct((np_rows, P * DO), jnp.float32),
            grid_spec=pltpu.PrefetchScalarGridSpec(
                num_scalar_prefetch=0,
                grid=grid,
                in_specs=in_specs,
                out_specs=pl.BlockSpec((TMP, P * DO), lambda i: (i, 0)),
            ),
            compiler_params=pltpu.CompilerParams(
                dimension_semantics=("parallel",)
            ),
            cost_estimate=cost,
        )(packed, *weights)

        # free row-major view back to (n_tot, DO), drop padding, restore leading dims
        out = out.reshape(n_tot, DO)[:n_rows]
        return out.reshape(*features.shape[:-1], DO)

    # ------------------------------------------------------------------ refs
    def reference(self, features, *args, match_kernel_precision=False):
        inp = jnp.concatenate(
            [features.reshape(-1, features.shape[-1])]
            + [a.reshape(-1, a.shape[-1]) for a in args],
            axis=-1,
        )
        if match_kernel_precision:
            x = inp.astype(jnp.bfloat16)
            h = jnp.maximum(
                jnp.dot(x, self.w1, preferred_element_type=jnp.float32) + self.b1, 0.0)
            h = jnp.maximum(
                jnp.dot(h.astype(jnp.bfloat16), self.w2,
                        preferred_element_type=jnp.float32) + self.b2, 0.0)
            m = jax.nn.sigmoid(
                jnp.dot(h.astype(jnp.bfloat16), self.w3,
                        preferred_element_type=jnp.float32) + self.b3)
        else:
            x = inp.astype(jnp.float32)
            h = jnp.maximum(x @ self.w1_f32 + self.b1, 0.0)
            h = jnp.maximum(h @ self.w2_f32 + self.b2, 0.0)
            m = jax.nn.sigmoid(h @ self.w3_f32 + self.b3)
        m = m * self.out_scale + self.out_bias
        return m.reshape(*features.shape[:-1], self.n_output_dims)


# -----------------------------------------------------------------------------
# Main
# -----------------------------------------------------------------------------
if __name__ == "__main__":
    key = jax.random.PRNGKey(0)
    kf, ka = jax.random.split(key)

    # 2 "images" of 8x16 rays; 12-dim features + 4-dim extra arg = 16 input dims.
    # Inputs provided in bf16 so the kernel streams half the HBM bytes.
    features = jax.random.normal(kf, (2, 8, 16, 12), jnp.float32).astype(jnp.bfloat16)
    extra = jax.random.normal(ka, (2, 8, 16, 4), jnp.float32).astype(jnp.bfloat16)

    model = VolumeMaterialPallas(input_feature_dim=16, n_output_dims=5, hidden_dim=32)

    out = jax.block_until_ready(model(features, extra))
    assert out.shape == (2, 8, 16, 5), out.shape
    assert out.dtype == jnp.float32

    # exact-precision-matched reference (bf16 matmuls, f32 accum)
    ref_match = model.reference(features, extra, match_kernel_precision=True)
    assert jnp.allclose(out, ref_match, atol=2e-3, rtol=2e-3), float(
        jnp.max(jnp.abs(out - ref_match)))

    # f32 reference (loosened tolerance for bf16 streaming)
    ref_f32 = model.reference(features, extra)
    assert jnp.allclose(out, ref_f32, atol=2e-2, rtol=2e-2), float(
        jnp.max(jnp.abs(out - ref_f32)))

    # TODO(synk): `regularizations()` (GaussianHistogram albedo entropy, smoothness and
    # luminance energy-conservation losses) is training-time loss bookkeeping, not part
    # of forward(); not implemented.
    print("KERNEL_OK")
</pallas_src>

<mosaic_0001>
module attributes {stable_mosaic.version = 11 : i64} {
  func.func @_volume_material_kernel(%arg0: i32, %arg1: memref<16x64xbf16, #tpu.memory_space<vmem>>, %arg2: memref<64x128xbf16, #tpu.memory_space<vmem>>, %arg3: memref<128x128xbf16, #tpu.memory_space<vmem>>, %arg4: memref<128x20xbf16, #tpu.memory_space<vmem>>, %arg5: memref<2x128xf32, #tpu.memory_space<vmem>>, %arg6: memref<3x20xf32, #tpu.memory_space<vmem>>, %arg7: memref<16x20xf32, #tpu.memory_space<vmem>>) attributes {dimension_semantics = [#tpu.dimension_semantics<parallel>], iteration_bounds = array<i64: 4>, scalar_prefetch = 0 : i64, scratch_operands = 0 : i64, tpu.core_type = #tpu.core_type<tc>, window_params = [{transform_indices = @transform_0, window_bounds = array<i64: 16, 64>}, {pipeline_mode = #tpu.pipeline_mode<synchronous>, transform_indices = @transform_1, window_bounds = array<i64: 64, 128>}, {pipeline_mode = #tpu.pipeline_mode<synchronous>, transform_indices = @transform_2, window_bounds = array<i64: 128, 128>}, {pipeline_mode = #tpu.pipeline_mode<synchronous>, transform_indices = @transform_3, window_bounds = array<i64: 128, 20>}, {pipeline_mode = #tpu.pipeline_mode<synchronous>, transform_indices = @transform_4, window_bounds = array<i64: 2, 128>}, {pipeline_mode = #tpu.pipeline_mode<synchronous>, transform_indices = @transform_5, window_bounds = array<i64: 3, 20>}, {transform_indices = @transform_6, window_bounds = array<i64: 16, 20>}]} {
    %c0 = arith.constant 0 : index
    %c0_0 = arith.constant 0 : index
    %0 = vector.load %arg1[%c0, %c0_0] : memref<16x64xbf16, #tpu.memory_space<vmem>>, vector<16x64xbf16>
    %c0_1 = arith.constant 0 : index
    %c0_2 = arith.constant 0 : index
    %1 = vector.load %arg2[%c0_1, %c0_2] : memref<64x128xbf16, #tpu.memory_space<vmem>>, vector<64x128xbf16>
    %cst = arith.constant dense<0.000000e+00> : vector<16x128xf32>
    %2 = tpu.matmul %0, %1, %cst {dimension_numbers = #tpu.dot_dimension_numbers<[1], [0], [0], [1], [0, 0, 1, 1], [], []>} : vector<16x64xbf16>, vector<64x128xbf16>, vector<16x128xf32> -> vector<16x128xf32>
    %c0_3 = arith.constant 0 : index
    %c0_4 = arith.constant 0 : index
    %3 = vector.load %arg5[%c0_3, %c0_4] : memref<2x128xf32, #tpu.memory_space<vmem>>, vector<1x128xf32>
    %4 = vector.broadcast %3 : vector<1x128xf32> to vector<16x128xf32>
    %5 = arith.addf %2, %4 : vector<16x128xf32>
    %cst_5 = arith.constant 0.000000e+00 : f32
    %6 = vector.broadcast %cst_5 : f32 to vector<16x128xf32>
    %7 = arith.maximumf %5, %6 : vector<16x128xf32>
    %8 = arith.truncf %7 : vector<16x128xf32> to vector<16x128xbf16>
    %c0_6 = arith.constant 0 : index
    %c0_7 = arith.constant 0 : index
    %9 = vector.load %arg3[%c0_6, %c0_7] : memref<128x128xbf16, #tpu.memory_space<vmem>>, vector<128x128xbf16>
    %cst_8 = arith.constant dense<0.000000e+00> : vector<16x128xf32>
    %10 = tpu.matmul %8, %9, %cst_8 {dimension_numbers = #tpu.dot_dimension_numbers<[1], [0], [0], [1], [0, 0, 1, 1], [], []>} : vector<16x128xbf16>, vector<128x128xbf16>, vector<16x128xf32> -> vector<16x128xf32>
    %c1 = arith.constant 1 : index
    %c0_9 = arith.constant 0 : index
    %11 = vector.load %arg5[%c1, %c0_9] : memref<2x128xf32, #tpu.memory_space<vmem>>, vector<1x128xf32>
    %12 = vector.broadcast %11 : vector<1x128xf32> to vector<16x128xf32>
    %13 = arith.addf %10, %12 : vector<16x128xf32>
    %cst_10 = arith.constant 0.000000e+00 : f32
    %14 = vector.broadcast %cst_10 : f32 to vector<16x128xf32>
    %15 = arith.maximumf %13, %14 : vector<16x128xf32>
    %16 = arith.truncf %15 : vector<16x128xf32> to vector<16x128xbf16>
    %c0_11 = arith.constant 0 : index
    %c0_12 = arith.constant 0 : index
    %17 = vector.load %arg4[%c0_11, %c0_12] : memref<128x20xbf16, #tpu.memory_space<vmem>>, vector<128x20xbf16>
    %cst_13 = arith.constant dense<0.000000e+00> : vector<16x20xf32>
    %18 = tpu.matmul %16, %17, %cst_13 {dimension_numbers = #tpu.dot_dimension_numbers<[1], [0], [0], [1], [0, 0, 1, 1], [], []>} : vector<16x128xbf16>, vector<128x20xbf16>, vector<16x20xf32> -> vector<16x20xf32>
    %c0_14 = arith.constant 0 : index
    %c0_15 = arith.constant 0 : index
    %19 = vector.load %arg6[%c0_14, %c0_15] : memref<3x20xf32, #tpu.memory_space<vmem>>, vector<1x20xf32>
    %20 = vector.broadcast %19 : vector<1x20xf32> to vector<16x20xf32>
    %21 = arith.addf %18, %20 : vector<16x20xf32>
    %22 = arith.negf %21 : vector<16x20xf32>
    %23 = math.exp %22 : vector<16x20xf32>
    %cst_16 = arith.constant 1.000000e+00 : f32
    %24 = vector.broadcast %cst_16 : f32 to vector<16x20xf32>
    %25 = arith.addf %24, %23 : vector<16x20xf32>
    %26 = arith.divf %24, %25 : vector<16x20xf32>
    %c1_17 = arith.constant 1 : index
    %c0_18 = arith.constant 0 : index
    %27 = vector.load %arg6[%c1_17, %c0_18] : memref<3x20xf32, #tpu.memory_space<vmem>>, vector<1x20xf32>
    %28 = vector.broadcast %27 : vector<1x20xf32> to vector<16x20xf32>
    %29 = arith.mulf %26, %28 : vector<16x20xf32>
    %c2 = arith.constant 2 : index
    %c0_19 = arith.constant 0 : index
    %30 = vector.load %arg6[%c2, %c0_19] : memref<3x20xf32, #tpu.memory_space<vmem>>, vector<1x20xf32>
    %31 = vector.broadcast %30 : vector<1x20xf32> to vector<16x20xf32>
    %32 = arith.addf %29, %31 : vector<16x20xf32>
    %c0_20 = arith.constant 0 : index
    %c0_21 = arith.constant 0 : index
    %33 = vector.load %arg7[%c0_20, %c0_21] : memref<16x20xf32, #tpu.memory_space<vmem>>, vector<16x20xf32>
    tpu.vector_store %arg7[%c0_20, %c0_21], %32 {strides = array<i32>} : memref<16x20xf32, #tpu.memory_space<vmem>>, vector<16x20xf32>,
    return
  }
  func.func @transform_0(%arg0: i32) -> (i32, i32) {
    %c0_i32 = arith.constant 0 : i32
    %c0_i32_0 = arith.constant 0 : i32
    return %arg0, %c0_i32 : i32, i32
  }
  func.func @transform_1(%arg0: i32) -> (i32, i32) {
    %c0_i32 = arith.constant 0 : i32
    %c0_i32_0 = arith.constant 0 : i32
    %c0_i32_1 = arith.constant 0 : i32
    return %c0_i32, %c0_i32_0 : i32, i32
  }
  func.func @transform_2(%arg0: i32) -> (i32, i32) {
    %c0_i32 = arith.constant 0 : i32
    %c0_i32_0 = arith.constant 0 : i32
    %c0_i32_1 = arith.constant 0 : i32
    return %c0_i32, %c0_i32_0 : i32, i32
  }
  func.func @transform_3(%arg0: i32) -> (i32, i32) {
    %c0_i32 = arith.constant 0 : i32
    %c0_i32_0 = arith.constant 0 : i32
    %c0_i32_1 = arith.constant 0 : i32
    return %c0_i32, %c0_i32_0 : i32, i32
  }
  func.func @transform_4(%arg0: i32) -> (i32, i32) {
    %c0_i32 = arith.constant 0 : i32
    %c0_i32_0 = arith.constant 0 : i32
    %c0_i32_1 = arith.constant 0 : i32
    return %c0_i32, %c0_i32_0 : i32, i32
  }
  func.func @transform_5(%arg0: i32) -> (i32, i32) {
    %c0_i32 = arith.constant 0 : i32
    %c0_i32_0 = arith.constant 0 : i32
    %c0_i32_1 = arith.constant 0 : i32
    return %c0_i32, %c0_i32_0 : i32, i32
  }
  func.func @transform_6(%arg0: i32) -> (i32, i32) {
    %c0_i32 = arith.constant 0 : i32
    %c0_i32_0 = arith.constant 0 : i32
    return %arg0, %c0_i32 : i32, i32
  }
}

</mosaic_0001>

<llo_original>
// kernel: a_call__.1
$region0: #{a_call__.1}
  #allocation0 [shape = 'u32[]', space=smem, size = 0x4, offset = 0x4, fixed_abs, tag = 'smem constant byte address 0x4 - core index']
  #allocation1 [shape = 'u32[144,128]{1,0:T(1,128)}', space=vmem, size = 0x12000, scoped, tag = 'internal scratch']
  %s0 = inlined_call_operand.vmem [shape: bf16[64,64], index: 0, kind: input, shape index: {}]
  %s1 = inlined_call_operand.vmem [shape: bf16[64,128], index: 1, kind: input, shape index: {}]
  %s2 = inlined_call_operand.vmem [shape: bf16[128,128], index: 2, kind: input, shape index: {}]
  %s3 = inlined_call_operand.vmem [shape: bf16[128,20], index: 3, kind: input, shape index: {}]
  %s4 = inlined_call_operand.vmem [shape: f32[2,128], index: 4, kind: input, shape index: {}]
  %s5 = inlined_call_operand.vmem [shape: f32[3,20], index: 5, kind: input, shape index: {}]
  %s6 = inlined_call_operand.vmem [shape: f32[64,20], index: 6, kind: output, shape index: {}]
  %s7 = sld [smem:[#allocation0]]
  $region57: #{a_call__.1} parent=0
    _
  %s9 = ssub.s32 1, %s7
  %s10 = scalar_select 0, %s9, %s7
  loop: start=0, step=1, limit=6
  $region2: #{a_call__.1} parent=0 // loop_pre_header
    _
  $region3: #{a_call__.1} parent=0 // loop_header
    %s12 = sphi 0, %s16
    %p13 = scmp.ge.s32.totalorder %s12, 6
    %s22 = sphi 0, %s24
    %s25 = sphi 0, %s22
    %s26 = sphi 0, %s25
    %s42 = sphi 0, %s26
    %s46 = sphi 0, %s46
    %s48 = sphi 0, %s46
    %s49 = sphi 0, %s48
    %s63 = sphi 0, %s49
    %s67 = sphi 0, %s67
    %s69 = sphi 0, %s67
    %s70 = sphi 0, %s69
    %s84 = sphi 0, %s70
    %s88 = sphi 0, %s88
    %s90 = sphi 0, %s88
    %s91 = sphi 0, %s90
    %s105 = sphi 0, %s91
    %s109 = sphi 0, %s109
    %s111 = sphi 0, %s109
    %s112 = sphi 0, %s111
    %s126 = sphi 0, %s112
    %s130 = sphi 0, %s130
    %s132 = sphi 0, %s130
    %s133 = sphi 0, %s132
    %s147 = sphi 0, %s133
    %s153 = sphi 0, %s155
    %s156 = sphi 0, %s153
    %s157 = sphi 0, %s156
    %s173 = sphi 0, %s157
  $region4: #{a_call__.1} parent=0 // loop_header_branch
    %15 = sbr.rel (%p13) target = $region8
  $region5: #{a_call__.1} parent=0 // loop_body
    %s17 = ssub.s32 %s12, 1
    %s18 = ssub.s32 %s12, 2
    %s19 = sadd.s32 %s12, 1
    %s20 = ssub.s32 %s12, %s19
    %p21 = scmp.eq.s32.totalorder %s20, 0
    %s23 = sadd.s32 %s22, 1
    %s24 = scalar_select %p21, %s22, %s23
    %p27 = pneg %p21
    %p28 = scmp.eq.s32.totalorder %s12, 3
    %p29 = por %p27, %p28
    %p30 = scmp.ne.s32.totalorder %s22, %s25
    %p31 = scmp.eq.s32.totalorder %s12, 0
    %p32 = por %p30, %p31
    %p33 = scmp.ne.s32.totalorder %s22, %s25
    %p34 = scmp.eq.s32.totalorder %s17, 3
    %p35 = por %p33, %p34
    %p36 = scmp.ne.s32.totalorder %s25, %s26
    %p37 = scmp.eq.s32.totalorder %s17, 0
    %p38 = por %p36, %p37
    %p39 = scmp.ne.s32.totalorder %s25, %s26
    %p40 = scmp.eq.s32.totalorder %s18, 3
    %p41 = por %p39, %p40
    %p43 = scmp.ne.s32.totalorder %s26, %s42
    %p44 = scmp.eq.s32.totalorder %s18, 0
    %p45 = por %p43, %p44
    %s47 = sadd.s32 %s46, 1
    %p50 = scmp.eq.s32.totalorder %s12, 3
    %p51 = scmp.ne.s32.totalorder %s46, %s48
    %p52 = scmp.eq.s32.totalorder %s12, 0
    %p53 = por %p51, %p52
    %p54 = scmp.ne.s32.totalorder %s46, %s48
    %p55 = scmp.eq.s32.totalorder %s17, 3
    %p56 = por %p54, %p55
    %p57 = scmp.ne.s32.totalorder %s48, %s49
    %p58 = scmp.eq.s32.totalorder %s17, 0
    %p59 = por %p57, %p58
    %p60 = scmp.ne.s32.totalorder %s48, %s49
    %p61 = scmp.eq.s32.totalorder %s18, 3
    %p62 = por %p60, %p61
    %p64 = scmp.ne.s32.totalorder %s49, %s63
    %p65 = scmp.eq.s32.totalorder %s18, 0
    %p66 = por %p64, %p65
    %s68 = sadd.s32 %s67, 1
    %p71 = scmp.eq.s32.totalorder %s12, 3
    %p72 = scmp.ne.s32.totalorder %s67, %s69
    %p73 = scmp.eq.s32.totalorder %s12, 0
    %p74 = por %p72, %p73
    %p75 = scmp.ne.s32.totalorder %s67, %s69
    %p76 = scmp.eq.s32.totalorder %s17, 3
    %p77 = por %p75, %p76
    %p78 = scmp.ne.s32.totalorder %s69, %s70
    %p79 = scmp.eq.s32.totalorder %s17, 0
    %p80 = por %p78, %p79
    %p81 = scmp.ne.s32.totalorder %s69, %s70
    %p82 = scmp.eq.s32.totalorder %s18, 3
    %p83 = por %p81, %p82
    %p85 = scmp.ne.s32.totalorder %s70, %s84
    %p86 = scmp.eq.s32.totalorder %s18, 0
    %p87 = por %p85, %p86
    %s89 = sadd.s32 %s88, 1
    %p92 = scmp.eq.s32.totalorder %s12, 3
    %p93 = scmp.ne.s32.totalorder %s88, %s90
    %p94 = scmp.eq.s32.totalorder %s12, 0
    %p95 = por %p93, %p94
    %p96 = scmp.ne.s32.totalorder %s88, %s90
    %p97 = scmp.eq.s32.totalorder %s17, 3
    %p98 = por %p96, %p97
    %p99 = scmp.ne.s32.totalorder %s90, %s91
    %p100 = scmp.eq.s32.totalorder %s17, 0
    %p101 = por %p99, %p100
    %p102 = scmp.ne.s32.totalorder %s90, %s91
    %p103 = scmp.eq.s32.totalorder %s18, 3
    %p104 = por %p102, %p103
    %p106 = scmp.ne.s32.totalorder %s91, %s105
    %p107 = scmp.eq.s32.totalorder %s18, 0
    %p108 = por %p106, %p107
    %s110 = sadd.s32 %s109, 1
    %p113 = scmp.eq.s32.totalorder %s12, 3
    %p114 = scmp.ne.s32.totalorder %s109, %s111
    %p115 = scmp.eq.s32.totalorder %s12, 0
    %p116 = por %p114, %p115
    %p117 = scmp.ne.s32.totalorder %s109, %s111
    %p118 = scmp.eq.s32.totalorder %s17, 3
    %p119 = por %p117, %p118
    %p120 = scmp.ne.s32.totalorder %s111, %s112
    %p121 = scmp.eq.s32.totalorder %s17, 0
    %p122 = por %p120, %p121
    %p123 = scmp.ne.s32.totalorder %s111, %s112
    %p124 = scmp.eq.s32.totalorder %s18, 3
    %p125 = por %p123, %p124
    %p127 = scmp.ne.s32.totalorder %s112, %s126
    %p128 = scmp.eq.s32.totalorder %s18, 0
    %p129 = por %p127, %p128
    %s131 = sadd.s32 %s130, 1
    %p134 = scmp.eq.s32.totalorder %s12, 3
    %p135 = scmp.ne.s32.totalorder %s130, %s132
    %p136 = scmp.eq.s32.totalorder %s12, 0
    %p137 = por %p135, %p136
    %p138 = scmp.ne.s32.totalorder %s130, %s132
    %p139 = scmp.eq.s32.totalorder %s17, 3
    %p140 = por %p138, %p139
    %p141 = scmp.ne.s32.totalorder %s132, %s133
    %p142 = scmp.eq.s32.totalorder %s17, 0
    %p143 = por %p141, %p142
    %p144 = scmp.ne.s32.totalorder %s132, %s133
    %p145 = scmp.eq.s32.totalorder %s18, 3
    %p146 = por %p144, %p145
    %p148 = scmp.ne.s32.totalorder %s133, %s147
    %p149 = scmp.eq.s32.totalorder %s18, 0
    %p150 = por %p148, %p149
    %s151 = ssub.s32 %s12, %s19
    %p152 = scmp.eq.s32.totalorder %s151, 0
    %s154 = sadd.s32 %s153, 1
    %s155 = scalar_select %p152, %s153, %s154
    %p158 = pneg %p152
    %p159 = scmp.eq.s32.totalorder %s12, 3
    %p160 = por %p158, %p159
    %p161 = scmp.ne.s32.totalorder %s153, %s156
    %p162 = scmp.eq.s32.totalorder %s12, 0
    %p163 = por %p161, %p162
    %p164 = scmp.ne.s32.totalorder %s153, %s156
    %p165 = scmp.eq.s32.totalorder %s17, 3
    %p166 = por %p164, %p165
    %p167 = scmp.ne.s32.totalorder %s156, %s157
    %p168 = scmp.eq.s32.totalorder %s17, 0
    %p169 = por %p167, %p168
    %p170 = scmp.ne.s32.totalorder %s156, %s157
    %p171 = scmp.eq.s32.totalorder %s18, 3
    %p172 = por %p170, %p171
    %p174 = scmp.ne.s32.totalorder %s157, %s173
    %p175 = scmp.eq.s32.totalorder %s18, 0
    %p176 = por %p174, %p175
    %p177 = scmp.le.s32.totalorder 1, %s12
    %p178 = scmp.lt.s32.totalorder %s12, 5
    %p179 = pnand %p177, %p178
    %p180 = pneg %p179
    // Predicated region
    $region9: #{a_call__.1} parent=5 // pred_check
      _
    $region10: #{a_call__.1} parent=5 // pred_check_branch
      %182 = sbr.rel (%p179) target = $region12
    $region11: #{a_call__.1} parent=5 // pred_region
      %s183 = ssub.s32 %s12, 1
      // Predicated region
      $region13: #{a_call__.1} parent=11 // pred_check
        %p184 = pneg %p59
      $region14: #{a_call__.1} parent=11 // pred_check_branch
        %186 = sbr.rel (%p184) target = $region16
      $region15: #{a_call__.1} parent=11 // pred_region
        _
      $region16: #{a_call__.1} parent=11 // pred_fallthru
        _
      // Predicated region
      $region17: #{a_call__.1} parent=11 // pred_check
        %p187 = pneg %p80
      $region18: #{a_call__.1} parent=11 // pred_check_branch
        %189 = sbr.rel (%p187) target = $region20
      $region19: #{a_call__.1} parent=11 // pred_region
        _
      $region20: #{a_call__.1} parent=11 // pred_fallthru
        _
      // Predicated region
      $region21: #{a_call__.1} parent=11 // pred_check
        %p190 = pneg %p101
      $region22: #{a_call__.1} parent=11 // pred_check_branch
        %192 = sbr.rel (%p190) target = $region24
      $region23: #{a_call__.1} parent=11 // pred_region
        _
      $region24: #{a_call__.1} parent=11 // pred_fallthru
        _
      // Predicated region
      $region25: #{a_call__.1} parent=11 // pred_check
        %p193 = pneg %p122
      $region26: #{a_call__.1} parent=11 // pred_check_branch
        %195 = sbr.rel (%p193) target = $region28
      $region27: #{a_call__.1} parent=11 // pred_region
        _
      $region28: #{a_call__.1} parent=11 // pred_fallthru
        _
      // Predicated region
      $region29: #{a_call__.1} parent=11 // pred_check
        %p196 = pneg %p143
      $region30: #{a_call__.1} parent=11 // pred_check_branch
        %198 = sbr.rel (%p196) target = $region32
      $region31: #{a_call__.1} parent=11 // pred_region
        _
      $region32: #{a_call__.1} parent=11 // pred_fallthru
        _
    $region12: #{a_call__.1} parent=5 // pred_fallthru
      _
    %p199 = scmp.lt.s32.totalorder %s12, 4
    // Predicated region
    $region33: #{a_call__.1} parent=5 // pred_check
      %p200 = pneg %p199
    $region34: #{a_call__.1} parent=5 // pred_check_branch
      %202 = sbr.rel (%p200) target = $region36
    $region35: #{a_call__.1} parent=5 // pred_region
      // Predicated region
      $region37: #{a_call__.1} parent=35 // pred_check
        %p203 = pneg %p32
      $region38: #{a_call__.1} parent=35 // pred_check_branch
        %205 = sbr.rel (%p203) target = $region40
      $region39: #{a_call__.1} parent=35 // pred_region
        %s206 = smul.u32 2, %s12
        %p207 = scmp.lt.s32.totalorder %s206, 7
        %s208 = scalar_select %p207, %s206, 7
        %s209 = smul.addr %s208, 4
        %s210 = scalar_lea.vmem %s0, %s209
        %s211 = smul.u32 2, %s12
      $region40: #{a_call__.1} parent=35 // pred_fallthru
        _
    $region36: #{a_call__.1} parent=5 // pred_fallthru
      _
    %p212 = scmp.le.s32.totalorder 1, %s12
    %p213 = scmp.lt.s32.totalorder %s12, 5
    %p214 = pnand %p212, %p213
    %p215 = pneg %p214
    // Predicated region
    $region41: #{a_call__.1} parent=5 // pred_check
      _
    $region42: #{a_call__.1} parent=5 // pred_check_branch
      %217 = sbr.rel (%p214) target = $region44
    $region43: #{a_call__.1} parent=5 // pred_region
      %s218 = ssub.s32 %s12, 1
      %s219 = smul.u32 2, %s17
      %p220 = scmp.lt.s32.totalorder %s219, 7
      %s221 = scalar_select %p220, %s219, 7
      %s222 = smul.addr %s221, 4
      %s223 = scalar_lea.vmem %s0, %s222
      %p224 = pneg %p38
      %p225 = pneg %p35
      %p226 = pneg %p59
      %p227 = pneg %p56
      %p228 = pneg %p80
      %p229 = pneg %p77
      %p230 = pneg %p101
      %p231 = pneg %p98
      %p232 = pneg %p122
      %p233 = pneg %p119
      %p234 = pneg %p143
      %p235 = pneg %p140
      %p236 = pneg %p169
      %p237 = pneg %p166
      %s238 = smul.u32 2, %s17
      %p239 = scmp.lt.s32.totalorder %s238, 7
      %s240 = scalar_select %p239, %s238, 7
      %s241 = smul.addr %s240, 8
      %s242 = scalar_lea.vmem %s6, %s241
      %s243 = smul.u32 2, %s17
      %p244 = scmp.lt.s32.totalorder %s243, 7
      %s245 = scalar_select %p244, %s243, 7
      %s246 = smul.addr %s245, 4
      %s247 = scalar_lea.vmem %s0, %s246
      %s248 = smul.u32 2, %s17
      %s249 = smul.u32 2, %s17
      %p250 = scmp.lt.s32.totalorder %s249, 7
      %s251 = scalar_select %p250, %s249, 7
      %s252 = smul.addr %s251, 8
      %s253 = scalar_lea.vmem %s6, %s252
      %s254 = smul.u32 2, %s17
      %v256 = vld [vmem:[%s247] sm:$0xf]
      %v257 = vld [vmem:[%s247 + $0x4] sm:$0xf]
      %v258 = vld [vmem:[%s1] sm:$0xf]
      %v259 = vld [vmem:[%s1 + $0x4] sm:$0xf]
      %v260 = vld [vmem:[%s1 + $0x8] sm:$0xf]
      %v261 = vld [vmem:[%s1 + $0xc] sm:$0xf]
      %v262 = vld [vmem:[%s1 + $0x10] sm:$0xf]
      %v263 = vld [vmem:[%s1 + $0x14] sm:$0xf]
      %v264 = vld [vmem:[%s1 + $0x18] sm:$0xf]
      %v265 = vld [vmem:[%s1 + $0x1c] sm:$0xf]
      %v266 = vld [vmem:[%s4] sm:$0x1]
      %v267 = vlaneseq
      %v268 = vshrl.u32 %v267, 7
      %v269 = vsub.s32 0, %v268
      %v270 = vrot.slane %v266, %v269
      %v273 = vunpack.c.l.b16 %v256
      %v274 = vunpack.c.l.b16 %v257
      %v275 = vpack.c.b16 %v274, %v273
      %v284 = vunpack.c.l.b16 %v258
      %v285 = vunpack.c.l.b16 %v259
      %v286 = vunpack.c.l.b16 %v260
      %v287 = vunpack.c.l.b16 %v261
      %v288 = vunpack.c.l.b16 %v262
      %v289 = vunpack.c.l.b16 %v263
      %v290 = vunpack.c.l.b16 %v264
      %v291 = vunpack.c.l.b16 %v265
      %v292 = vpack.c.b16 %v285, %v284
      %v293 = vpack.c.b16 %v287, %v286
      %v294 = vpack.c.b16 %v289, %v288
      %v295 = vpack.c.b16 %v291, %v290
      %vm300 = vcmask 523264
      %v302 = vsel %vm300, %v275, 0
      %304 = vmatprep.subr.bf16.mxu0 0
      %305 = vmatpush1.bf16.msra.mxu0 %v292
      %306 = vmatprep.subr.bf16.mxu0 0
      %307 = vmatpush1.bf16.msra.mxu0 %v293
      %308 = vmatprep.subr.bf16.mxu0 0
      %309 = vmatpush1.bf16.msra.mxu0 %v294
      %310 = vmatprep.subr.bf16.mxu0 0
      %311 = vmatpush1.bf16.msra.mxu0 %v295
      %312 = vmatprep.subr.bf16.mxu0 0
      %313 = vmatpush1.bf16.msra.mxu0 0
      %314 = vmatprep.subr.bf16.mxu0 0
      %315 = vmatpush1.bf16.msra.mxu0 0
      %316 = vmatprep.subr.bf16.mxu0 0
      %317 = vmatpush1.bf16.msra.mxu0 0
      %318 = vmatprep.subr.bf16.mxu0 0
      %319 = vmatpush1.bf16.msra.mxu0 0
      %320 = vmatprep.subr.bf16.mxu0 0
      %321 = vmatpush1.bf16.msra.mxu0 0
      %322 = vmatprep.subr.bf16.mxu0 0
      %323 = vmatpush1.bf16.msra.mxu0 0
      %324 = vmatprep.subr.bf16.mxu0 0
      %325 = vmatpush1.bf16.msra.mxu0 0
      %326 = vmatprep.subr.bf16.mxu0 0
      %327 = vmatpush1.bf16.msra.mxu0 0
      %328 = vmatprep.subr.bf16.mxu0 0
      %329 = vmatpush1.bf16.msra.mxu0 0
      %330 = vmatprep.subr.bf16.mxu0 0
      %331 = vmatpush1.bf16.msra.mxu0 0
      %332 = vmatprep.subr.bf16.mxu0 0
      %333 = vmatpush1.bf16.msra.mxu0 0
      %334 = vmatprep.subr.bf16.mxu0 0
      %335 = vmatpush1.bf16.msra.mxu0 0
      %336 = vmatprep.mubr.bf16.mxu0 0
      %337 = vmatmul.mubr.bf16.gmra.mrb[0].mxu0 %v302
      %v338 = vpop.f32.mrb[0].mxu0
      %v339 = vadd.f32 %v270, %v338
      %v340 = vpop.f32.mrb[0].mxu0
      %v341 = vpop.f32.mrb[0].mxu0
      %v342 = vadd.f32 %v270, %v341
      %v343 = vpop.f32.mrb[0].mxu0
      %344 = vdwg.mxu0
      %v345 = vmax.f32 %v339, 0.0
      %v346 = vmax.f32 %v342, 0.0
      %v347 = vpack.c.bf16 %v346, %v345
      %v348 = vld [vmem:[%s2] sm:$0xf]
      %v349 = vld [vmem:[%s2 + $0x4] sm:$0xf]
      %v350 = vld [vmem:[%s2 + $0x8] sm:$0xf]
      %v351 = vld [vmem:[%s2 + $0xc] sm:$0xf]
      %v352 = vld [vmem:[%s2 + $0x10] sm:$0xf]
      %v353 = vld [vmem:[%s2 + $0x14] sm:$0xf]
      %v354 = vld [vmem:[%s2 + $0x18] sm:$0xf]
      %v355 = vld [vmem:[%s2 + $0x1c] sm:$0xf]
      %v356 = vld [vmem:[%s2 + $0x20] sm:$0xf]
      %v357 = vld [vmem:[%s2 + $0x24] sm:$0xf]
      %v358 = vld [vmem:[%s2 + $0x28] sm:$0xf]
      %v359 = vld [vmem:[%s2 + $0x2c] sm:$0xf]
      %v360 = vld [vmem:[%s2 + $0x30] sm:$0xf]
      %v361 = vld [vmem:[%s2 + $0x34] sm:$0xf]
      %v362 = vld [vmem:[%s2 + $0x38] sm:$0xf]
      %v363 = vld [vmem:[%s2 + $0x3c] sm:$0xf]
      %v364 = vld [vmem:[%s4 + $0x1] sm:$0x1]
      %v365 = vlaneseq
      %v366 = vshrl.u32 %v365, 7
      %v367 = vsub.s32 0, %v366
      %v368 = vrot.slane %v364, %v367
      %v385 = vunpack.c.l.b16 %v348
      %v386 = vunpack.c.l.b16 %v349
      %v387 = vunpack.c.l.b16 %v350
      %v388 = vunpack.c.l.b16 %v351
      %v389 = vunpack.c.l.b16 %v352
      %v390 = vunpack.c.l.b16 %v353
      %v391 = vunpack.c.l.b16 %v354
      %v392 = vunpack.c.l.b16 %v355
      %v393 = vunpack.c.l.b16 %v356
      %v394 = vunpack.c.l.b16 %v357
      %v395 = vunpack.c.l.b16 %v358
      %v396 = vunpack.c.l.b16 %v359
      %v397 = vunpack.c.l.b16 %v360
      %v398 = vunpack.c.l.b16 %v361
      %v399 = vunpack.c.l.b16 %v362
      %v400 = vunpack.c.l.b16 %v363
      %v401 = vpack.c.b16 %v386, %v385
      %v402 = vpack.c.b16 %v388, %v387
      %v403 = vpack.c.b16 %v390, %v389
      %v404 = vpack.c.b16 %v392, %v391
      %v405 = vpack.c.b16 %v394, %v393
      %v406 = vpack.c.b16 %v396, %v395
      %v407 = vpack.c.b16 %v398, %v397
      %v408 = vpack.c.b16 %v400, %v399
      %417 = vmatprep.subr.bf16.mxu0 0
      %418 = vmatpush1.bf16.msra.mxu0 %v401
      %419 = vmatprep.subr.bf16.mxu0 0
      %420 = vmatpush1.bf16.msra.mxu0 %v402
      %421 = vmatprep.subr.bf16.mxu0 0
      %422 = vmatpush1.bf16.msra.mxu0 %v403
      %423 = vmatprep.subr.bf16.mxu0 0
      %424 = vmatpush1.bf16.msra.mxu0 %v404
      %425 = vmatprep.subr.bf16.mxu0 0
      %426 = vmatpush1.bf16.msra.mxu0 %v405
      %427 = vmatprep.subr.bf16.mxu0 0
      %428 = vmatpush1.bf16.msra.mxu0 %v406
      %429 = vmatprep.subr.bf16.mxu0 0
      %430 = vmatpush1.bf16.msra.mxu0 %v407
      %431 = vmatprep.subr.bf16.mxu0 0
      %432 = vmatpush1.bf16.msra.mxu0 %v408
      %433 = vmatprep.subr.bf16.mxu0 0
      %434 = vmatpush1.bf16.msra.mxu0 0
      %435 = vmatprep.subr.bf16.mxu0 0
      %436 = vmatpush1.bf16.msra.mxu0 0
      %437 = vmatprep.subr.bf16.mxu0 0
      %438 = vmatpush1.bf16.msra.mxu0 0
      %439 = vmatprep.subr.bf16.mxu0 0
      %440 = vmatpush1.bf16.msra.mxu0 0
      %441 = vmatprep.subr.bf16.mxu0 0
      %442 = vmatpush1.bf16.msra.mxu0 0
      %443 = vmatprep.subr.bf16.mxu0 0
      %444 = vmatpush1.bf16.msra.mxu0 0
      %445 = vmatprep.subr.bf16.mxu0 0
      %446 = vmatpush1.bf16.msra.mxu0 0
      %447 = vmatprep.subr.bf16.mxu0 0
      %448 = vmatpush1.bf16.msra.mxu0 0
      %449 = vmatprep.mubr.bf16.mxu0 0
      %450 = vmatmul.mubr.bf16.gmra.mrb[0].mxu0 %v347
      %v451 = vpop.f32.mrb[0].mxu0
      %v452 = vadd.f32 %v368, %v451
      %v453 = vpop.f32.mrb[0].mxu0
      %v454 = vpop.f32.mrb[0].mxu0
      %v455 = vadd.f32 %v368, %v454
      %v456 = vpop.f32.mrb[0].mxu0
      %457 = vdwg.mxu0
      %v458 = vmax.f32 %v452, 0.0
      %v459 = vmax.f32 %v455, 0.0
      %v460 = vpack.c.bf16 %v459, %v458
      %v461 = vld [vmem:[%s3] sm:$0xf]
      %v462 = vld [vmem:[%s3 + $0x4] sm:$0xf]
      %v463 = vld [vmem:[%s3 + $0x8] sm:$0xf]
      %v464 = vld [vmem:[%s3 + $0xc] sm:$0xf]
      %v465 = vld [vmem:[%s3 + $0x10] sm:$0xf]
      %v466 = vld [vmem:[%s3 + $0x14] sm:$0xf]
      %v467 = vld [vmem:[%s3 + $0x18] sm:$0xf]
      %v468 = vld [vmem:[%s3 + $0x1c] sm:$0xf]
      %v469 = vld [vmem:[%s3 + $0x20] sm:$0xf]
      %v470 = vld [vmem:[%s3 + $0x24] sm:$0xf]
      %v471 = vld [vmem:[%s3 + $0x28] sm:$0xf]
      %v472 = vld [vmem:[%s3 + $0x2c] sm:$0xf]
      %v473 = vld [vmem:[%s3 + $0x30] sm:$0xf]
      %v474 = vld [vmem:[%s3 + $0x34] sm:$0xf]
      %v475 = vld [vmem:[%s3 + $0x38] sm:$0xf]
      %v476 = vld [vmem:[%s3 + $0x3c] sm:$0xf]
      %v477 = vld [vmem:[%s5] sm:$0x1]
      %v478 = vlaneseq
      %v479 = vshrl.u32 %v478, 7
      %v480 = vsub.s32 0, %v479
      %v481 = vrot.slane %v477, %v480
      %v498 = vunpack.c.l.b16 %v461
      %v499 = vunpack.c.l.b16 %v462
      %v500 = vunpack.c.l.b16 %v463
      %v501 = vunpack.c.l.b16 %v464
      %v502 = vunpack.c.l.b16 %v465
      %v503 = vunpack.c.l.b16 %v466
      %v504 = vunpack.c.l.b16 %v467
      %v505 = vunpack.c.l.b16 %v468
      %v506 = vunpack.c.l.b16 %v469
      %v507 = vunpack.c.l.b16 %v470
      %v508 = vunpack.c.l.b16 %v471
      %v509 = vunpack.c.l.b16 %v472
      %v510 = vunpack.c.l.b16 %v473
      %v511 = vunpack.c.l.b16 %v474
      %v512 = vunpack.c.l.b16 %v475
      %v513 = vunpack.c.l.b16 %v476
      %v514 = vpack.c.b16 %v499, %v498
      %v515 = vpack.c.b16 %v501, %v500
      %v516 = vpack.c.b16 %v503, %v502
      %v517 = vpack.c.b16 %v505, %v504
      %v518 = vpack.c.b16 %v507, %v506
      %v519 = vpack.c.b16 %v509, %v508
      %v520 = vpack.c.b16 %v511, %v510
      %v521 = vpack.c.b16 %v513, %v512
      %530 = vmatprep.subr.bf16.mxu0 0
      %531 = vmatpush1.bf16.msra.mxu0 %v514
      %532 = vmatprep.subr.bf16.mxu0 0
      %533 = vmatpush1.bf16.msra.mxu0 %v515
      %534 = vmatprep.subr.bf16.mxu0 0
      %535 = vmatpush1.bf16.msra.mxu0 %v516
      %536 = vmatprep.subr.bf16.mxu0 0
      %537 = vmatpush1.bf16.msra.mxu0 %v517
      %538 = vmatprep.subr.bf16.mxu0 0
      %539 = vmatpush1.bf16.msra.mxu0 %v518
      %540 = vmatprep.subr.bf16.mxu0 0
      %541 = vmatpush1.bf16.msra.mxu0 %v519
      %542 = vmatprep.subr.bf16.mxu0 0
      %543 = vmatpush1.bf16.msra.mxu0 %v520
      %544 = vmatprep.subr.bf16.mxu0 0
      %545 = vmatpush1.bf16.msra.mxu0 %v521
      %546 = vmatprep.subr.bf16.mxu0 0
      %547 = vmatpush1.bf16.msra.mxu0 0
      %548 = vmatprep.subr.bf16.mxu0 0
      %549 = vmatpush1.bf16.msra.mxu0 0
      %550 = vmatprep.subr.bf16.mxu0 0
      %551 = vmatpush1.bf16.msra.mxu0 0
      %552 = vmatprep.subr.bf16.mxu0 0
      %553 = vmatpush1.bf16.msra.mxu0 0
      %554 = vmatprep.subr.bf16.mxu0 0
      %555 = vmatpush1.bf16.msra.mxu0 0
      %556 = vmatprep.subr.bf16.mxu0 0
      %557 = vmatpush1.bf16.msra.mxu0 0
      %558 = vmatprep.subr.bf16.mxu0 0
      %559 = vmatpush1.bf16.msra.mxu0 0
      %560 = vmatprep.subr.bf16.mxu0 0
      %561 = vmatpush1.bf16.msra.mxu0 0
      %562 = vmatprep.mubr.bf16.mxu0 0
      %563 = vmatmul.mubr.bf16.gmra.mrb[0].mxu0 %v460
      %v564 = vpop.f32.mrb[0].mxu0
      %v565 = vadd.f32 %v481, %v564
      %v566 = vpop.f32.mrb[0].mxu0
      %v567 = vpop.f32.mrb[0].mxu0
      %v568 = vadd.f32 %v481, %v567
      %v569 = vpop.f32.mrb[0].mxu0
      %570 = vdwg.mxu0
      %v571 = vxor.u32 %v565, 2147483648
      %v572 = vxor.u32 %v568, 2147483648
      %v573 = vmul.f32 %v571, 1.442695
      %v574 = vpow.pop %v573
      %v575 = vmul.f32 %v572, 1.442695
      %v576 = vpow.pop %v575
      %v577 = vadd.f32 %v574, 1.0
      %v578 = vadd.f32 %v576, 1.0
      %v579 = vrcp.pop %v577
      %v580 = vmul.f32 1.0, %v579
      %v581 = vrcp.pop %v578
      %v582 = vmul.f32 1.0, %v581
      %v583 = vld [vmem:[%s5 + $0x1] sm:$0x1]
      %v584 = vlaneseq
      %v585 = vshrl.u32 %v584, 7
      %v586 = vsub.s32 0, %v585
      %v587 = vrot.slane %v583, %v586
      %v588 = vmul.f32 %v580, %v587
      %v589 = vmul.f32 %v582, %v587
      %v590 = vld [vmem:[%s5 + $0x2] sm:$0x1]
      %v591 = vlaneseq
      %v592 = vshrl.u32 %v591, 7
      %v593 = vsub.s32 0, %v592
      %v594 = vrot.slane %v590, %v593
      %v595 = vadd.f32 %v588, %v594
      %v596 = vadd.f32 %v589, %v594
      %vm597 = vcmask 162816
      %598 = vst.msk [vmem:[%s253] sm:$0xff] %vm597, %v595
      %599 = vst.msk [vmem:[%s253 + $0x8] sm:$0xff] %vm597, %v596
      %s600 = smul.u32 2, %s17
      %p601 = scmp.lt.s32.totalorder %s600, 7
      %s602 = scalar_select %p601, %s600, 7
      %s603 = smul.addr %s602, 8
      %s604 = scalar_lea.vmem %s6, %s603
      // Predicated region
      $region45: #{a_call__.1} parent=43 // pred_check
        %p605 = pneg %p166
      $region46: #{a_call__.1} parent=43 // pred_check_branch
        %607 = sbr.rel (%p605) target = $region48
      $region47: #{a_call__.1} parent=43 // pred_region
        %s608 = smul.u32 2, %s17
      $region48: #{a_call__.1} parent=43 // pred_fallthru
        _
    $region44: #{a_call__.1} parent=5 // pred_fallthru
      _
    %p609 = scmp.le.s32.totalorder 2, %s12
    // Predicated region
    $region49: #{a_call__.1} parent=5 // pred_check
      %p610 = pneg %p609
    $region50: #{a_call__.1} parent=5 // pred_check_branch
      %612 = sbr.rel (%p610) target = $region52
    $region51: #{a_call__.1} parent=5 // pred_region
      %s613 = ssub.s32 %s12, 2
      // Predicated region
      $region53: #{a_call__.1} parent=51 // pred_check
        %p614 = pneg %p172
      $region54: #{a_call__.1} parent=51 // pred_check_branch
        %616 = sbr.rel (%p614) target = $region56
      $region55: #{a_call__.1} parent=51 // pred_region
        %s617 = smul.u32 2, %s18
        %p618 = scmp.lt.s32.totalorder %s617, 7
        %s619 = scalar_select %p618, %s617, 7
        %s620 = smul.addr %s619, 8
        %s621 = scalar_lea.vmem %s6, %s620
      $region56: #{a_call__.1} parent=51 // pred_fallthru
        _
    $region52: #{a_call__.1} parent=5 // pred_fallthru
      _
  $region6: #{a_call__.1} parent=0 // loop_footer
    %s16 = sadd.s32 1, %s12
  $region7: #{a_call__.1} parent=0 // loop_footer_branch
    %11 = sbr.rel target = $region3
  $region8: #{a_call__.1} parent=0 // loop_exit
    _

</llo_original>
